<compile_context>
chip_gen: v6e
topology: v6e:2x2x1
jax: 0.10.0
libtpu: 0.0.40
codegen_flags: <defaults>
</compile_context>

<pallas_src>
import functools

import jax
import jax.numpy as jnp
from jax.experimental import pallas as pl
from jax.experimental.pallas import tpu as pltpu

LANE = 128        # TPU lane width — hidden dims are padded to this inside the slab
H1, H2 = 64, 32   # hidden sizes from the PyTorch module


def _dqn_kernel(x_ref, w_ref, b_ref, out_ref, *, state_size, action_size):
    # x_ref:   (TB, S)        f32   (streamed per grid step)
    # w_ref:   (3, 128, 128)  compute dtype (VMEM-resident, constant block index)
    # b_ref:   (3, 128)       f32   (VMEM-resident)
    # out_ref: (TB, A)        f32
    cdt = w_ref.dtype
    x = x_ref[...].astype(cdt)

    # Layer 1: (TB,S) @ (S,128) + b, ReLU   (f32 accumulation, bias/ReLU in f32)
    h = jnp.dot(x, w_ref[0, :state_size, :], preferred_element_type=jnp.float32)
    h = jnp.maximum(h + b_ref[0:1, :], 0.0)

    # Layer 2: (TB,128) @ (128,128) + b, ReLU
    h = jnp.dot(h.astype(cdt), w_ref[1], preferred_element_type=jnp.float32)
    h = jnp.maximum(h + b_ref[1:2, :], 0.0)

    # Output layer: (TB,128) @ (128,128) + b, then store only the A real lanes.
    q = jnp.dot(h.astype(cdt), w_ref[2], preferred_element_type=jnp.float32)
    q = q + b_ref[2:3, :]
    out_ref[...] = q[:, :action_size].astype(out_ref.dtype)


def _pack_params(params, compute_dtype):
    """Pack the 3 (in_features, out_features) weights into one (3,128,128) slab
    (compute dtype) and the 3 biases into one (3,128) f32 slab. Zero padding is
    numerically exact. Requires state_size <= 128 and action_size <= 128."""
    w1, b1 = params["w1"], params["b1"]   # (S,64), (1,64)
    w2, b2 = params["w2"], params["b2"]   # (64,32), (1,32)
    w3, b3 = params["w3"], params["b3"]   # (32,A), (1,A)
    S = w1.shape[0]
    A = w3.shape[1]
    if S > LANE or A > LANE:
        raise ValueError(
            f"state_size ({S}) and action_size ({A}) must both be <= {LANE} "
            "for this packed-slab kernel."
        )
    W = jnp.zeros((3, LANE, LANE), compute_dtype)
    W = W.at[0, :S, :H1].set(w1.astype(compute_dtype))
    W = W.at[1, :H1, :H2].set(w2.astype(compute_dtype))
    W = W.at[2, :H2, :A].set(w3.astype(compute_dtype))
    Bb = jnp.zeros((3, LANE), jnp.float32)
    Bb = Bb.at[0, :H1].set(b1.reshape(-1).astype(jnp.float32))
    Bb = Bb.at[1, :H2].set(b2.reshape(-1).astype(jnp.float32))
    Bb = Bb.at[2, :A].set(b3.reshape(-1).astype(jnp.float32))
    return W, Bb, S, A


def _round_up8(n):
    return max(8, ((n + 7) // 8) * 8)


def simple_dqn_forward(x, params, *, block_b=2048, compute_dtype=jnp.bfloat16,
                       min_split=256):
    """Fused forward pass of SimpleDQN.

    x: (B, state_size) float array
    params: dict of w1 (S,64), b1 (1,64), w2 (64,32), b2 (1,32), w3 (32,A), b3 (1,A)
    compute_dtype: matmul operand dtype (bf16 default; accumulation is always f32)
    returns: (B, action_size) float32
    """
    W, Bb, S, A = _pack_params(params, compute_dtype)
    B = x.shape[0]
    assert x.shape[1] == S, (x.shape, S)

    # Batch tile: multiple of 8 sublanes.  For large batches cap TB at ~B/2 so
    # the "parallel" batch axis has >= 2 grid steps (keeps both v7x TCs busy);
    # for small batches a single latency-bound step is optimal.
    if B >= min_split:
        TB = min(int(block_b), _round_up8(-(-B // 2)))
    else:
        TB = min(int(block_b), _round_up8(B))
    grid = (pl.cdiv(B, TB),)

    # Actual (padded) work / traffic for XLA's scheduler.
    w_bytes = int(W.size) * jnp.dtype(compute_dtype).itemsize
    flops = 2 * B * (S * LANE + LANE * LANE + LANE * LANE)
    bytes_accessed = B * S * 4 + B * A * 4 + w_bytes + 3 * LANE * 4

    kernel = functools.partial(_dqn_kernel, state_size=S, action_size=A)

    out = pl.pallas_call(
        kernel,
        out_shape=jax.ShapeDtypeStruct((B, A), jnp.float32),
        grid=grid,
        in_specs=[
            # batch-streamed activations at their natural (TB, S) shape
            pl.BlockSpec((TB, S), lambda i: (i, 0)),
            # packed weights / biases: constant block index -> VMEM-resident
            pl.BlockSpec((3, LANE, LANE), lambda i: (0, 0, 0)),
            pl.BlockSpec((3, LANE), lambda i: (0, 0)),
        ],
        out_specs=pl.BlockSpec((TB, A), lambda i: (i, 0)),
        compiler_params=pltpu.CompilerParams(
            dimension_semantics=("parallel",),     # shard batch over 2 TCs on v7x
            vmem_limit_bytes=32 * 1024 * 1024,     # headroom on v5e's 16 MiB default
        ),
        cost_estimate=pl.CostEstimate(
            flops=flops, transcendentals=0, bytes_accessed=bytes_accessed
        ),
    )(x.astype(jnp.float32), W, Bb)
    return out


def init_params(key, state_size, action_size):
    """Deterministic init mimicking PyTorch nn.Linear default
    (uniform(-1/sqrt(fan_in), 1/sqrt(fan_in)) for weight and bias).
    Weights are stored as (in_features, out_features)."""
    dims = [(state_size, 64), (64, 32), (32, action_size)]
    params = {}
    for i, (fan_in, fan_out) in enumerate(dims, start=1):
        key, kw, kb = jax.random.split(key, 3)
        bound = 1.0 / jnp.sqrt(jnp.float32(fan_in))
        params[f"w{i}"] = jax.random.uniform(
            kw, (fan_in, fan_out), jnp.float32, -bound, bound
        )
        params[f"b{i}"] = jax.random.uniform(
            kb, (1, fan_out), jnp.float32, -bound, bound
        )
    return params


def reference_forward(x, params):
    h1 = jnp.maximum(x @ params["w1"] + params["b1"], 0.0)
    h2 = jnp.maximum(h1 @ params["w2"] + params["b2"], 0.0)
    return h2 @ params["w3"] + params["b3"]


if __name__ == "__main__":
    key = jax.random.PRNGKey(0)
    batch, state_size, action_size = 8, 16, 4

    key, kx = jax.random.split(key)
    x = jax.random.normal(kx, (batch, state_size), jnp.float32)
    params = init_params(key, state_size, action_size)
    ref = reference_forward(x, params)

    # Default (bf16 compute, f32 accumulation) path.
    out = jax.block_until_ready(simple_dqn_forward(x, params))
    assert out.shape == (batch, action_size)
    assert jnp.allclose(out, ref, atol=5e-2, rtol=5e-2), float(
        jnp.max(jnp.abs(out - ref))
    )

    # f32 compute path (validates that the padded-slab scheme itself is exact).
    out_f32 = jax.block_until_ready(
        simple_dqn_forward(x, params, compute_dtype=jnp.float32)
    )
    assert jnp.allclose(out_f32, ref, atol=1e-2, rtol=1e-2)

    # Tiny batch (< 8 rows) exercises the masked partial sublane tile.
    x_tiny = x[:3]
    out_tiny = jax.block_until_ready(
        simple_dqn_forward(x_tiny, params, compute_dtype=jnp.float32)
    )
    assert out_tiny.shape == (3, action_size)
    assert jnp.allclose(out_tiny, reference_forward(x_tiny, params),
                        atol=1e-2, rtol=1e-2)

    # Larger, non-multiple batch exercises grid > 1, the >=2-step megacore split,
    # and the masked boundary block.
    key, kx2 = jax.random.split(key)
    x_big = jax.random.normal(kx2, (1030, state_size), jnp.float32)
    out_big = jax.block_until_ready(simple_dqn_forward(x_big, params))
    ref_big = reference_forward(x_big, params)
    assert out_big.shape == (1030, action_size)
    assert jnp.allclose(out_big, ref_big, atol=5e-2, rtol=5e-2)

    print("KERNEL_OK")
</pallas_src>

<mosaic_0001>
module attributes {stable_mosaic.version = 11 : i64} {
  func.func @_dqn_kernel(%arg0: i32, %arg1: memref<8x16xf32, #tpu.memory_space<vmem>>, %arg2: memref<3x128x128xbf16, #tpu.memory_space<vmem>>, %arg3: memref<3x128xf32, #tpu.memory_space<vmem>>, %arg4: memref<8x4xf32, #tpu.memory_space<vmem>>) attributes {dimension_semantics = [#tpu.dimension_semantics<parallel>], iteration_bounds = array<i64: 1>, scalar_prefetch = 0 : i64, scratch_operands = 0 : i64, tpu.core_type = #tpu.core_type<tc>, window_params = [{transform_indices = @transform_0, window_bounds = array<i64: 8, 16>}, {pipeline_mode = #tpu.pipeline_mode<synchronous>, transform_indices = @transform_1, window_bounds = array<i64: 3, 128, 128>}, {pipeline_mode = #tpu.pipeline_mode<synchronous>, transform_indices = @transform_2, window_bounds = array<i64: 3, 128>}, {transform_indices = @transform_3, window_bounds = array<i64: 8, 4>}]} {
    %c0 = arith.constant 0 : index
    %c0_0 = arith.constant 0 : index
    %0 = vector.load %arg1[%c0, %c0_0] : memref<8x16xf32, #tpu.memory_space<vmem>>, vector<8x16xf32>
    %1 = arith.truncf %0 : vector<8x16xf32> to vector<8x16xbf16>
    %c0_1 = arith.constant 0 : index
    %c0_2 = arith.constant 0 : index
    %c0_3 = arith.constant 0 : index
    %2 = vector.load %arg2[%c0_1, %c0_2, %c0_3] : memref<3x128x128xbf16, #tpu.memory_space<vmem>>, vector<1x16x128xbf16>
    %3 = vector.shape_cast %2 : vector<1x16x128xbf16> to vector<16x128xbf16>
    %cst = arith.constant dense<0.000000e+00> : vector<8x128xf32>
    %4 = tpu.matmul %1, %3, %cst {dimension_numbers = #tpu.dot_dimension_numbers<[1], [0], [0], [1], [0, 0, 1, 1], [], []>} : vector<8x16xbf16>, vector<16x128xbf16>, vector<8x128xf32> -> vector<8x128xf32>
    %c0_4 = arith.constant 0 : index
    %c0_5 = arith.constant 0 : index
    %5 = vector.load %arg3[%c0_4, %c0_5] : memref<3x128xf32, #tpu.memory_space<vmem>>, vector<1x128xf32>
    %6 = vector.broadcast %5 : vector<1x128xf32> to vector<8x128xf32>
    %7 = arith.addf %4, %6 : vector<8x128xf32>
    %cst_6 = arith.constant 0.000000e+00 : f32
    %8 = vector.broadcast %cst_6 : f32 to vector<8x128xf32>
    %9 = arith.maximumf %7, %8 : vector<8x128xf32>
    %10 = arith.truncf %9 : vector<8x128xf32> to vector<8x128xbf16>
    %c1 = arith.constant 1 : index
    %c0_7 = arith.constant 0 : index
    %c0_8 = arith.constant 0 : index
    %11 = vector.load %arg2[%c1, %c0_7, %c0_8] : memref<3x128x128xbf16, #tpu.memory_space<vmem>>, vector<1x128x128xbf16>
    %12 = vector.shape_cast %11 : vector<1x128x128xbf16> to vector<128x128xbf16>
    %cst_9 = arith.constant dense<0.000000e+00> : vector<8x128xf32>
    %13 = tpu.matmul %10, %12, %cst_9 {dimension_numbers = #tpu.dot_dimension_numbers<[1], [0], [0], [1], [0, 0, 1, 1], [], []>} : vector<8x128xbf16>, vector<128x128xbf16>, vector<8x128xf32> -> vector<8x128xf32>
    %c1_10 = arith.constant 1 : index
    %c0_11 = arith.constant 0 : index
    %14 = vector.load %arg3[%c1_10, %c0_11] : memref<3x128xf32, #tpu.memory_space<vmem>>, vector<1x128xf32>
    %15 = vector.broadcast %14 : vector<1x128xf32> to vector<8x128xf32>
    %16 = arith.addf %13, %15 : vector<8x128xf32>
    %cst_12 = arith.constant 0.000000e+00 : f32
    %17 = vector.broadcast %cst_12 : f32 to vector<8x128xf32>
    %18 = arith.maximumf %16, %17 : vector<8x128xf32>
    %19 = arith.truncf %18 : vector<8x128xf32> to vector<8x128xbf16>
    %c2 = arith.constant 2 : index
    %c0_13 = arith.constant 0 : index
    %c0_14 = arith.constant 0 : index
    %20 = vector.load %arg2[%c2, %c0_13, %c0_14] : memref<3x128x128xbf16, #tpu.memory_space<vmem>>, vector<1x128x128xbf16>
    %21 = vector.shape_cast %20 : vector<1x128x128xbf16> to vector<128x128xbf16>
    %cst_15 = arith.constant dense<0.000000e+00> : vector<8x128xf32>
    %22 = tpu.matmul %19, %21, %cst_15 {dimension_numbers = #tpu.dot_dimension_numbers<[1], [0], [0], [1], [0, 0, 1, 1], [], []>} : vector<8x128xbf16>, vector<128x128xbf16>, vector<8x128xf32> -> vector<8x128xf32>
    %c2_16 = arith.constant 2 : index
    %c0_17 = arith.constant 0 : index
    %23 = vector.load %arg3[%c2_16, %c0_17] : memref<3x128xf32, #tpu.memory_space<vmem>>, vector<1x128xf32>
    %24 = vector.broadcast %23 : vector<1x128xf32> to vector<8x128xf32>
    %25 = arith.addf %22, %24 : vector<8x128xf32>
    %26 = vector.extract_strided_slice %25 {offsets = [0, 0], sizes = [8, 4], strides = [1, 1]} : vector<8x128xf32> to vector<8x4xf32>
    %c0_18 = arith.constant 0 : index
    %c0_19 = arith.constant 0 : index
    %27 = vector.load %arg4[%c0_18, %c0_19] : memref<8x4xf32, #tpu.memory_space<vmem>>, vector<8x4xf32>
    tpu.vector_store %arg4[%c0_18, %c0_19], %26 {strides = array<i32>} : memref<8x4xf32, #tpu.memory_space<vmem>>, vector<8x4xf32>,
    return
  }
  func.func @transform_0(%arg0: i32) -> (i32, i32) {
    %c0_i32 = arith.constant 0 : i32
    %c0_i32_0 = arith.constant 0 : i32
    return %arg0, %c0_i32 : i32, i32
  }
  func.func @transform_1(%arg0: i32) -> (i32, i32, i32) {
    %c0_i32 = arith.constant 0 : i32
    %c0_i32_0 = arith.constant 0 : i32
    %c0_i32_1 = arith.constant 0 : i32
    %c0_i32_2 = arith.constant 0 : i32
    return %c0_i32, %c0_i32_0, %c0_i32_1 : i32, i32, i32
  }
  func.func @transform_2(%arg0: i32) -> (i32, i32) {
    %c0_i32 = arith.constant 0 : i32
    %c0_i32_0 = arith.constant 0 : i32
    %c0_i32_1 = arith.constant 0 : i32
    return %c0_i32, %c0_i32_0 : i32, i32
  }
  func.func @transform_3(%arg0: i32) -> (i32, i32) {
    %c0_i32 = arith.constant 0 : i32
    %c0_i32_0 = arith.constant 0 : i32
    return %arg0, %c0_i32 : i32, i32
  }
}

</mosaic_0001>

<llo_original>
// kernel: tpu_custom_call.1
$region0: #{tpu_custom_call.1}
  #allocation0 [shape = 'u32[]', space=smem, size = 0x4, offset = 0x4, fixed_abs, tag = 'smem constant byte address 0x4 - core index']
  #allocation1 [shape = 'u32[144,128]{1,0:T(1,128)}', space=vmem, size = 0x12000, scoped, tag = 'internal scratch']
  %s0 = inlined_call_operand.hbm [shape: f32[8,16], index: 0, kind: input, shape index: {}]
  %s1 = inlined_call_operand.hbm [shape: bf16[3,128,128], index: 1, kind: input, shape index: {}]
  %s2 = inlined_call_operand.hbm [shape: f32[3,128], index: 2, kind: input, shape index: {}]
  %s3 = inlined_call_operand.vmem [shape: f32[8,4], index: 3, kind: output, shape index: {}]
  %s4 = sld [smem:[#allocation0]]
  $region34: #{tpu_custom_call.1} parent=0
    _
  %s6 = ssub.s32 1, %s4
  %s7 = scalar_select 0, %s6, %s4
  $region1: #{tpu_custom_call.1} parent=0
    #allocation2 [shape = 'u8[4096]{0}', space=vmem, size = 0x1000, scoped, tag = 'input window, operand 0, single buffered']
    #allocation3 [shape = 's32[1]{0}', space=sflag, size = 0x4, scoped, tag = 'scoped memory for tpu_custom_call.1']
    #allocation4 [shape = 'u8[98304]{0}', space=vmem, size = 0x18000, scoped, tag = 'input window, operand 1, single buffered']
    #allocation5 [shape = 's32[1]{0}', space=sflag, size = 0x4, scoped, tag = 'scoped memory for tpu_custom_call.1']
    #allocation6 [shape = 'u8[2048]{0}', space=vmem, size = 0x800, scoped, tag = 'input window, operand 2, single buffered']
    %8 = vsyncpa [#allocation3], 0
    %9 = vsyncpa [#allocation5], 0
    // Predicated region
    $region2: #{tpu_custom_call.1} parent=1 // pred_check
      _
    $region3: #{tpu_custom_call.1} parent=1 // pred_check_branch
      %11 = sbr.rel (0) target = $region5
    $region4: #{tpu_custom_call.1} parent=1 // pred_region
      %s13 = ssub.s32 128, 128
      %14 = vsyncadd [#allocation3], %s13
      %s16 = sshll.u32 [#allocation2], 4
      %s17 = int_to_ptr.vmem [resolvable:$true] %s16
      %19 = dma.hbm_to_vmem [thread:$0]  %s0, 128, %s17, [#allocation3]
    $region5: #{tpu_custom_call.1} parent=1 // pred_fallthru
      _
    // Predicated region
    $region6: #{tpu_custom_call.1} parent=1 // pred_check
      _
    $region7: #{tpu_custom_call.1} parent=1 // pred_check_branch
      %21 = sbr.rel (0) target = $region9
    $region8: #{tpu_custom_call.1} parent=1 // pred_region
      %s23 = ssub.s32 3072, 3072
      %24 = vsyncadd [#allocation5], %s23
      %s25 = sshll.u32 [#allocation4], 4
      %s26 = int_to_ptr.vmem [resolvable:$true] %s25
      %31 = dma.hbm_to_vmem [thread:$0]  %s1, 3072, %s26, [#allocation5], 64, 64, 4
    $region9: #{tpu_custom_call.1} parent=1 // pred_fallthru
      _
    // Predicated region
    $region10: #{tpu_custom_call.1} parent=1 // pred_check
      _
    $region11: #{tpu_custom_call.1} parent=1 // pred_check_branch
      %33 = sbr.rel (0) target = $region13
    $region12: #{tpu_custom_call.1} parent=1 // pred_region
      %s35 = ssub.s32 64, 64
      %36 = vsyncadd [#allocation5], %s35
      %s38 = sshll.u32 [#allocation6], 4
      %s39 = int_to_ptr.vmem [resolvable:$true] %s38
      %41 = dma.hbm_to_vmem [thread:$0]  %s2, 64, %s39, [#allocation5]
    $region13: #{tpu_custom_call.1} parent=1 // pred_fallthru
      _
    // Predicated region
    $region14: #{tpu_custom_call.1} parent=1 // pred_check
      _
    $region15: #{tpu_custom_call.1} parent=1 // pred_check_branch
      %43 = sbr.rel (0) target = $region17
    $region16: #{tpu_custom_call.1} parent=1 // pred_region
      %44 = dma.done [#allocation3], 128
    $region17: #{tpu_custom_call.1} parent=1 // pred_fallthru
      _
    // Predicated region
    $region18: #{tpu_custom_call.1} parent=1 // pred_check
      _
    $region19: #{tpu_custom_call.1} parent=1 // pred_check_branch
      %46 = sbr.rel (0) target = $region21
    $region20: #{tpu_custom_call.1} parent=1 // pred_region
      %47 = dma.done [#allocation5], 3072
    $region21: #{tpu_custom_call.1} parent=1 // pred_fallthru
      _
    // Predicated region
    $region22: #{tpu_custom_call.1} parent=1 // pred_check
      _
    $region23: #{tpu_custom_call.1} parent=1 // pred_check_branch
      %49 = sbr.rel (0) target = $region25
    $region24: #{tpu_custom_call.1} parent=1 // pred_region
      %50 = dma.done [#allocation5], 64
    $region25: #{tpu_custom_call.1} parent=1 // pred_fallthru
      _
    %v52 = vld [vmem:[#allocation2] sm:$0xff]
    %v53 = vpack.c.bf16 %v52, %v52
    %v54 = vld [vmem:[#allocation4] sm:$0xf]
    %v55 = vld [vmem:[#allocation4 + $0x4] sm:$0xf]
    %v56 = vld [vmem:[#allocation6] sm:$0x1]
    %v57 = vlaneseq
    %v58 = vshrl.u32 %v57, 7
    %v59 = vsub.s32 0, %v58
    %v60 = vrot.slane %v56, %v59
    %v63 = vunpack.c.l.b16 %v54
    %v64 = vunpack.c.l.b16 %v55
    %v65 = vpack.c.b16 %v64, %v63
    %vm67 = vcmask 130048
    %v69 = vsel %vm67, %v53, 0
    %71 = vmatprep.subr.bf16.mxu0 0
    %72 = vmatpush1.bf16.msra.mxu0 0
    %73 = vmatprep.subr.bf16.mxu0 0
    %74 = vmatpush1.bf16.msra.mxu0 0
    %75 = vmatprep.subr.bf16.mxu0 0
    %76 = vmatpush1.bf16.msra.mxu0 0
    %77 = vmatprep.subr.bf16.mxu0 0
    %78 = vmatpush1.bf16.msra.mxu0 0
    %79 = vmatprep.subr.bf16.mxu0 0
    %80 = vmatpush1.bf16.msra.mxu0 0
    %81 = vmatprep.subr.bf16.mxu0 0
    %82 = vmatpush1.bf16.msra.mxu0 0
    %83 = vmatprep.subr.bf16.mxu0 0
    %84 = vmatpush1.bf16.msra.mxu0 0
    %85 = vmatprep.subr.bf16.mxu0 0
    %86 = vmatpush1.bf16.msra.mxu0 %v65
    %87 = vmatprep.subr.bf16.mxu0 0
    %88 = vmatpush2.bf16.msra.mxu0 0
    %89 = vmatprep.subr.bf16.mxu0 0
    %90 = vmatpush2.bf16.msra.mxu0 0
    %91 = vmatprep.subr.bf16.mxu0 0
    %92 = vmatpush2.bf16.msra.mxu0 0
    %93 = vmatprep.subr.bf16.mxu0 0
    %94 = vmatpush2.bf16.msra.mxu0 0
    %95 = vmatprep.subr.bf16.mxu0 0
    %96 = vmatpush2.bf16.msra.mxu0 0
    %97 = vmatprep.subr.bf16.mxu0 0
    %98 = vmatpush2.bf16.msra.mxu0 0
    %99 = vmatprep.subr.bf16.mxu0 0
    %100 = vmatpush2.bf16.msra.mxu0 0
    %101 = vmatprep.subr.bf16.mxu0 0
    %102 = vmatpush2.bf16.msra.mxu0 0
    %103 = vmatprep.mubr.bf16.mxu0 0
    %104 = vmatmul.mubr.bf16.gmra.mxu0 %v69
    %v105 = vpop.f32.mrf.mxu0
    %v106 = vadd.f32 %v60, %v105
    %v107 = vpop.f32.mrf.mxu0
    %v108 = vpop.f32.mrf.mxu0
    %v109 = vpop.f32.mrf.mxu0
    %110 = vdwg.mxu0
    %v111 = vmax.f32 %v106, 0.0
    %v112 = vpack.c.bf16 %v111, %v111
    %s113 = scalar_lea.vmem [#allocation4], 64
    %v114 = vld [vmem:[%s113] sm:$0xf]
    %v115 = vld [vmem:[%s113 + $0x4] sm:$0xf]
    %v116 = vld [vmem:[%s113 + $0x8] sm:$0xf]
    %v117 = vld [vmem:[%s113 + $0xc] sm:$0xf]
    %v118 = vld [vmem:[%s113 + $0x10] sm:$0xf]
    %v119 = vld [vmem:[%s113 + $0x14] sm:$0xf]
    %v120 = vld [vmem:[%s113 + $0x18] sm:$0xf]
    %v121 = vld [vmem:[%s113 + $0x1c] sm:$0xf]
    %v122 = vld [vmem:[%s113 + $0x20] sm:$0xf]
    %v123 = vld [vmem:[%s113 + $0x24] sm:$0xf]
    %v124 = vld [vmem:[%s113 + $0x28] sm:$0xf]
    %v125 = vld [vmem:[%s113 + $0x2c] sm:$0xf]
    %v126 = vld [vmem:[%s113 + $0x30] sm:$0xf]
    %v127 = vld [vmem:[%s113 + $0x34] sm:$0xf]
    %v128 = vld [vmem:[%s113 + $0x38] sm:$0xf]
    %v129 = vld [vmem:[%s113 + $0x3c] sm:$0xf]
    %v130 = vld [vmem:[#allocation6 + $0x1] sm:$0x1]
    %v131 = vlaneseq
    %v132 = vshrl.u32 %v131, 7
    %v133 = vsub.s32 0, %v132
    %v134 = vrot.slane %v130, %v133
    %v151 = vunpack.c.l.b16 %v114
    %v152 = vunpack.c.l.b16 %v115
    %v153 = vunpack.c.l.b16 %v116
    %v154 = vunpack.c.l.b16 %v117
    %v155 = vunpack.c.l.b16 %v118
    %v156 = vunpack.c.l.b16 %v119
    %v157 = vunpack.c.l.b16 %v120
    %v158 = vunpack.c.l.b16 %v121
    %v159 = vunpack.c.l.b16 %v122
    %v160 = vunpack.c.l.b16 %v123
    %v161 = vunpack.c.l.b16 %v124
    %v162 = vunpack.c.l.b16 %v125
    %v163 = vunpack.c.l.b16 %v126
    %v164 = vunpack.c.l.b16 %v127
    %v165 = vunpack.c.l.b16 %v128
    %v166 = vunpack.c.l.b16 %v129
    %v167 = vpack.c.b16 %v152, %v151
    %v168 = vpack.c.b16 %v154, %v153
    %v169 = vpack.c.b16 %v156, %v155
    %v170 = vpack.c.b16 %v158, %v157
    %v171 = vpack.c.b16 %v160, %v159
    %v172 = vpack.c.b16 %v162, %v161
    %v173 = vpack.c.b16 %v164, %v163
    %v174 = vpack.c.b16 %v166, %v165
    %183 = vmatprep.subr.bf16.mxu0 0
    %184 = vmatpush1.bf16.msra.mxu0 %v174
    %185 = vmatprep.subr.bf16.mxu0 0
    %186 = vmatpush1.bf16.msra.mxu0 %v173
    %187 = vmatprep.subr.bf16.mxu0 0
    %188 = vmatpush1.bf16.msra.mxu0 %v172
    %189 = vmatprep.subr.bf16.mxu0 0
    %190 = vmatpush1.bf16.msra.mxu0 %v171
    %191 = vmatprep.subr.bf16.mxu0 0
    %192 = vmatpush1.bf16.msra.mxu0 %v170
    %193 = vmatprep.subr.bf16.mxu0 0
    %194 = vmatpush1.bf16.msra.mxu0 %v169
    %195 = vmatprep.subr.bf16.mxu0 0
    %196 = vmatpush1.bf16.msra.mxu0 %v168
    %197 = vmatprep.subr.bf16.mxu0 0
    %198 = vmatpush1.bf16.msra.mxu0 %v167
    %199 = vmatprep.subr.bf16.mxu0 0
    %200 = vmatpush2.bf16.msra.mxu0 0
    %201 = vmatprep.subr.bf16.mxu0 0
    %202 = vmatpush2.bf16.msra.mxu0 0
    %203 = vmatprep.subr.bf16.mxu0 0
    %204 = vmatpush2.bf16.msra.mxu0 0
    %205 = vmatprep.subr.bf16.mxu0 0
    %206 = vmatpush2.bf16.msra.mxu0 0
    %207 = vmatprep.subr.bf16.mxu0 0
    %208 = vmatpush2.bf16.msra.mxu0 0
    %209 = vmatprep.subr.bf16.mxu0 0
    %210 = vmatpush2.bf16.msra.mxu0 0
    %211 = vmatprep.subr.bf16.mxu0 0
    %212 = vmatpush2.bf16.msra.mxu0 0
    %213 = vmatprep.subr.bf16.mxu0 0
    %214 = vmatpush2.bf16.msra.mxu0 0
    %215 = vmatprep.mubr.bf16.mxu0 0
    %216 = vmatmul.mubr.bf16.gmra.mxu0 %v112
    %v217 = vpop.f32.mrf.mxu0
    %v218 = vadd.f32 %v134, %v217
    %v219 = vpop.f32.mrf.mxu0
    %v220 = vpop.f32.mrf.mxu0
    %v221 = vpop.f32.mrf.mxu0
    %222 = vdwg.mxu0
    %v223 = vmax.f32 %v218, 0.0
    %v224 = vpack.c.bf16 %v223, %v223
    %s225 = scalar_lea.vmem [#allocation4], 128
    %v226 = vld [vmem:[%s225] sm:$0xf]
    %v227 = vld [vmem:[%s225 + $0x4] sm:$0xf]
    %v228 = vld [vmem:[%s225 + $0x8] sm:$0xf]
    %v229 = vld [vmem:[%s225 + $0xc] sm:$0xf]
    %v230 = vld [vmem:[%s225 + $0x10] sm:$0xf]
    %v231 = vld [vmem:[%s225 + $0x14] sm:$0xf]
    %v232 = vld [vmem:[%s225 + $0x18] sm:$0xf]
    %v233 = vld [vmem:[%s225 + $0x1c] sm:$0xf]
    %v234 = vld [vmem:[%s225 + $0x20] sm:$0xf]
    %v235 = vld [vmem:[%s225 + $0x24] sm:$0xf]
    %v236 = vld [vmem:[%s225 + $0x28] sm:$0xf]
    %v237 = vld [vmem:[%s225 + $0x2c] sm:$0xf]
    %v238 = vld [vmem:[%s225 + $0x30] sm:$0xf]
    %v239 = vld [vmem:[%s225 + $0x34] sm:$0xf]
    %v240 = vld [vmem:[%s225 + $0x38] sm:$0xf]
    %v241 = vld [vmem:[%s225 + $0x3c] sm:$0xf]
    %v242 = vld [vmem:[#allocation6 + $0x2] sm:$0x1]
    %v243 = vlaneseq
    %v244 = vshrl.u32 %v243, 7
    %v245 = vsub.s32 0, %v244
    %v246 = vrot.slane %v242, %v245
    %v263 = vunpack.c.l.b16 %v226
    %v264 = vunpack.c.l.b16 %v227
    %v265 = vunpack.c.l.b16 %v228
    %v266 = vunpack.c.l.b16 %v229
    %v267 = vunpack.c.l.b16 %v230
    %v268 = vunpack.c.l.b16 %v231
    %v269 = vunpack.c.l.b16 %v232
    %v270 = vunpack.c.l.b16 %v233
    %v271 = vunpack.c.l.b16 %v234
    %v272 = vunpack.c.l.b16 %v235
    %v273 = vunpack.c.l.b16 %v236
    %v274 = vunpack.c.l.b16 %v237
    %v275 = vunpack.c.l.b16 %v238
    %v276 = vunpack.c.l.b16 %v239
    %v277 = vunpack.c.l.b16 %v240
    %v278 = vunpack.c.l.b16 %v241
    %v279 = vpack.c.b16 %v264, %v263
    %v280 = vpack.c.b16 %v266, %v265
    %v281 = vpack.c.b16 %v268, %v267
    %v282 = vpack.c.b16 %v270, %v269
    %v283 = vpack.c.b16 %v272, %v271
    %v284 = vpack.c.b16 %v274, %v273
    %v285 = vpack.c.b16 %v276, %v275
    %v286 = vpack.c.b16 %v278, %v277
    %295 = vmatprep.subr.bf16.mxu0 0
    %296 = vmatpush1.bf16.msra.mxu0 %v286
    %297 = vmatprep.subr.bf16.mxu0 0
    %298 = vmatpush1.bf16.msra.mxu0 %v285
    %299 = vmatprep.subr.bf16.mxu0 0
    %300 = vmatpush1.bf16.msra.mxu0 %v284
    %301 = vmatprep.subr.bf16.mxu0 0
    %302 = vmatpush1.bf16.msra.mxu0 %v283
    %303 = vmatprep.subr.bf16.mxu0 0
    %304 = vmatpush1.bf16.msra.mxu0 %v282
    %305 = vmatprep.subr.bf16.mxu0 0
    %306 = vmatpush1.bf16.msra.mxu0 %v281
    %307 = vmatprep.subr.bf16.mxu0 0
    %308 = vmatpush1.bf16.msra.mxu0 %v280
    %309 = vmatprep.subr.bf16.mxu0 0
    %310 = vmatpush1.bf16.msra.mxu0 %v279
    %311 = vmatprep.subr.bf16.mxu0 0
    %312 = vmatpush2.bf16.msra.mxu0 0
    %313 = vmatprep.subr.bf16.mxu0 0
    %314 = vmatpush2.bf16.msra.mxu0 0
    %315 = vmatprep.subr.bf16.mxu0 0
    %316 = vmatpush2.bf16.msra.mxu0 0
    %317 = vmatprep.subr.bf16.mxu0 0
    %318 = vmatpush2.bf16.msra.mxu0 0
    %319 = vmatprep.subr.bf16.mxu0 0
    %320 = vmatpush2.bf16.msra.mxu0 0
    %321 = vmatprep.subr.bf16.mxu0 0
    %322 = vmatpush2.bf16.msra.mxu0 0
    %323 = vmatprep.subr.bf16.mxu0 0
    %324 = vmatpush2.bf16.msra.mxu0 0
    %325 = vmatprep.subr.bf16.mxu0 0
    %326 = vmatpush2.bf16.msra.mxu0 0
    %327 = vmatprep.mubr.bf16.mxu0 0
    %328 = vmatmul.mubr.bf16.gmra.mxu0 %v224
    %v329 = vpop.f32.mrf.mxu0
    %v330 = vadd.f32 %v246, %v329
    %v331 = vpop.f32.mrf.mxu0
    %v332 = vpop.f32.mrf.mxu0
    %v333 = vpop.f32.mrf.mxu0
    %334 = vdwg.mxu0
    %vm335 = vcmask 31744
    %336 = vst.msk [vmem:[%s3] sm:$0xff] %vm335, %v330
    // Predicated region
    $region26: #{tpu_custom_call.1} parent=1 // pred_check
      _
    $region27: #{tpu_custom_call.1} parent=1 // pred_check_branch
      %338 = sbr.rel (0) target = $region29
    $region28: #{tpu_custom_call.1} parent=1 // pred_region
      _
    $region29: #{tpu_custom_call.1} parent=1 // pred_fallthru
      _
    // Predicated region
    $region30: #{tpu_custom_call.1} parent=1 // pred_check
      _
    $region31: #{tpu_custom_call.1} parent=1 // pred_check_branch
      %340 = sbr.rel (0) target = $region33
    $region32: #{tpu_custom_call.1} parent=1 // pred_region
      _
    $region33: #{tpu_custom_call.1} parent=1 // pred_fallthru
      _
    %341 = vsyncpa [#allocation3], 1
    %342 = vsyncpa [#allocation5], 1

</llo_original>
